<compile_context>
chip_gen: v7x
topology: tpu7x:2x2x1
jax: 0.10.0
libtpu: 0.0.40
codegen_flags: <defaults>
</compile_context>

<pallas_src>
import jax
import jax.numpy as jnp
from jax.experimental import pallas as pl
from jax.experimental.pallas import tpu as pltpu


def _round_up(x, m):
    return (x + m - 1) // m * m


def _cdiv(a, b):
    return -(-a // b)


def _ner_mlp_kernel(x_ref, w1_ref, b1_ref, w2_ref, b2_ref, w3_ref, b3_ref,
                    out_ref):
    # x_ref: (TM, vec_dim) f32 batch tile (K left unpadded -> minimal HBM read).
    # Weights bf16 (VMEM-resident via constant index_maps), biases f32.
    # out_ref: (TM, num_classes) f32 -- narrow masked store, but ~64x less HBM
    # writeback than a 128-lane padded slab.
    x = x_ref[...].astype(jnp.bfloat16)

    # Layer 1: Linear + ReLU (bf16 MXU matmul, f32 accumulate / bias / ReLU).
    h1 = jnp.dot(x, w1_ref[...], preferred_element_type=jnp.float32)
    h1 = jnp.maximum(h1 + b1_ref[...], 0.0).astype(jnp.bfloat16)

    # Layer 2: Linear + ReLU.
    h2 = jnp.dot(h1, w2_ref[...], preferred_element_type=jnp.float32)
    h2 = jnp.maximum(h2 + b2_ref[...], 0.0).astype(jnp.bfloat16)

    # Layer 3: Linear (logits, no activation). Computed at 128-lane width for
    # robust MXU lowering, sliced to the real class count before the store.
    logits = jnp.dot(h2, w3_ref[...], preferred_element_type=jnp.float32)
    logits = logits + b3_ref[...]
    out_ref[...] = logits[:, : out_ref.shape[-1]].astype(out_ref.dtype)


def init_params(key, vec_dim, num_classes, hidden_dim):
    """Deterministic synthetic parameters (shapes match NerNN.__init__),
    stored as [in_dim, out_dim] (transposed from nn.Linear's [out, in])."""
    ks = jax.random.split(key, 6)
    scale = 0.1
    return {
        "w1": scale * jax.random.normal(ks[0], (vec_dim, hidden_dim), jnp.float32),
        "b1": scale * jax.random.normal(ks[1], (hidden_dim,), jnp.float32),
        "w2": scale * jax.random.normal(ks[2], (hidden_dim, hidden_dim), jnp.float32),
        "b2": scale * jax.random.normal(ks[3], (hidden_dim,), jnp.float32),
        "w3": scale * jax.random.normal(ks[4], (hidden_dim, num_classes), jnp.float32),
        "b3": scale * jax.random.normal(ks[5], (num_classes,), jnp.float32),
    }


def prepare_params(params):
    """One-time bf16 weight cast + lane padding of the hidden/class dims.

    * w1 keeps K = vec_dim (no K padding) so the x stream stays f32/vec_dim.
    * hidden / class output dims are zero-padded to multiples of 128; padded
      hidden columns are ReLU(0+0)=0 so they contribute nothing downstream,
      and padded logit columns are sliced off inside the kernel.
    """
    w1, b1 = params["w1"], params["b1"]
    w2, b2 = params["w2"], params["b2"]
    w3, b3 = params["w3"], params["b3"]

    vec_dim, hidden = w1.shape
    num_classes = w3.shape[1]
    Hp = _round_up(hidden, 128)
    Cp = _round_up(num_classes, 128)

    def pad2(w, r, c):
        return jnp.pad(w, ((0, r - w.shape[0]), (0, c - w.shape[1])))

    def pad_bias(b, n):
        return jnp.pad(b, (0, n - b.shape[0])).reshape(1, n).astype(jnp.float32)

    return {
        "w1": pad2(w1, vec_dim, Hp).astype(jnp.bfloat16),
        "b1": pad_bias(b1, Hp),
        "w2": pad2(w2, Hp, Hp).astype(jnp.bfloat16),
        "b2": pad_bias(b2, Hp),
        "w3": pad2(w3, Hp, Cp).astype(jnp.bfloat16),
        "b3": pad_bias(b3, Cp),
        "logical_dims": (vec_dim, hidden, num_classes),
    }


def _choose_tiling(B):
    """Pick (TM, Bp) with TM a multiple of 8, minimal batch over-padding,
    >=2 grid steps for mid/large B (v7x megacore), and TM <= 2048 so
    double-buffered x/out tiles + (TM,128) activation temps stay well inside
    v5e's ~16 MiB default scoped VMEM."""
    TM_MAX = 2048
    if B <= 512:
        tm = _round_up(max(B, 1), 8)          # single grid step, minimal pad
        return tm, tm
    steps = max(2, _cdiv(B, TM_MAX))          # >=2 steps -> both v7x TCs busy
    tm = min(TM_MAX, _round_up(_cdiv(B, steps), 8))
    bp = _round_up(B, tm)
    return tm, bp


def ner_nn_forward(input_ids, prepared, labels=None):
    """Pallas equivalent of NerNN.forward.

    input_ids: [B, vec_dim] float32
    prepared:  output of prepare_params()
    returns (logits [B, num_classes], loss-or-None)
    """
    vec_dim, hidden, num_classes = prepared["logical_dims"]
    w1, b1 = prepared["w1"], prepared["b1"]
    w2, b2 = prepared["w2"], prepared["b2"]
    w3, b3 = prepared["w3"], prepared["b3"]

    B, in_dim = input_ids.shape
    assert in_dim == vec_dim
    Hp = w2.shape[0]
    Cp = w3.shape[1]

    TM, Bp = _choose_tiling(B)

    # Batch-only zero padding; x stays f32 (no wrapper cast -> no extra HBM pass).
    x = input_ids.astype(jnp.float32)
    if Bp != B:
        x = jnp.pad(x, ((0, Bp - B), (0, 0)))

    flops = 2 * Bp * (vec_dim * Hp + Hp * Hp + Hp * Cp)
    bytes_accessed = (Bp * vec_dim * 4                          # x (f32)
                      + (vec_dim * Hp + Hp * Hp + Hp * Cp) * 2  # weights (bf16)
                      + (2 * Hp + Cp) * 4                       # biases (f32)
                      + Bp * num_classes * 4)                   # logits out (f32, narrow)

    logits_padded = pl.pallas_call(
        _ner_mlp_kernel,
        out_shape=jax.ShapeDtypeStruct((Bp, num_classes), jnp.float32),
        grid=(Bp // TM,),
        in_specs=[
            pl.BlockSpec((TM, vec_dim), lambda i: (i, 0)),   # x: tiled over batch
            pl.BlockSpec((vec_dim, Hp), lambda i: (0, 0)),   # w1: pinned resident
            pl.BlockSpec((1, Hp), lambda i: (0, 0)),         # b1
            pl.BlockSpec((Hp, Hp), lambda i: (0, 0)),        # w2
            pl.BlockSpec((1, Hp), lambda i: (0, 0)),         # b2
            pl.BlockSpec((Hp, Cp), lambda i: (0, 0)),        # w3
            pl.BlockSpec((1, Cp), lambda i: (0, 0)),         # b3
        ],
        out_specs=pl.BlockSpec((TM, num_classes), lambda i: (i, 0)),
        compiler_params=pltpu.CompilerParams(
            dimension_semantics=("parallel",)),
        cost_estimate=pl.CostEstimate(
            flops=flops, transcendentals=0, bytes_accessed=bytes_accessed),
    )(x, w1, b1, w2, b2, w3, b3)

    logits = logits_padded[:B]

    if labels is not None:
        # nn.CrossEntropyLoss over flattened tokens, computed in plain JAX
        # (not worth a kernel). Honors PyTorch's default ignore_index=-100.
        # TODO(synk): PyTorch hardcodes .view(-1, 2); generalized to num_classes.
        flat_logits = logits.reshape(-1, num_classes)
        flat_labels = labels.reshape(-1)
        valid = flat_labels != -100
        safe_labels = jnp.where(valid, flat_labels, 0)
        logz = jax.nn.logsumexp(flat_logits, axis=-1)
        picked = jnp.take_along_axis(flat_logits, safe_labels[:, None], axis=-1)[:, 0]
        per_tok = jnp.where(valid, logz - picked, 0.0)
        loss = per_tok.sum() / jnp.maximum(valid.sum(), 1).astype(jnp.float32)
        return logits, loss
    return logits, None


if __name__ == "__main__":
    # Small shapes consistent with the module: batch of 8 token vectors,
    # vec_dim=32, hidden_dim=128 (module default), num_classes=2.
    B, VEC_DIM, HIDDEN, NUM_CLASSES = 8, 32, 128, 2

    key = jax.random.PRNGKey(0)
    k_x, k_p, k_l = jax.random.split(key, 3)

    x = jax.random.normal(k_x, (B, VEC_DIM), jnp.float32)
    params = init_params(k_p, VEC_DIM, NUM_CLASSES, HIDDEN)
    prepared = prepare_params(params)

    logits, loss = ner_nn_forward(x, prepared, labels=None)
    logits = jax.block_until_ready(logits)

    # Pure-JAX reference with the same numerics as the kernel
    # (bf16 operands, f32 accumulate, f32 bias/ReLU, bf16 re-cast).
    xb = x.astype(jnp.bfloat16)
    w1b = params["w1"].astype(jnp.bfloat16)
    w2b = params["w2"].astype(jnp.bfloat16)
    w3b = params["w3"].astype(jnp.bfloat16)
    h1 = jnp.maximum(jnp.dot(xb, w1b, preferred_element_type=jnp.float32)
                     + params["b1"], 0.0).astype(jnp.bfloat16)
    h2 = jnp.maximum(jnp.dot(h1, w2b, preferred_element_type=jnp.float32)
                     + params["b2"], 0.0).astype(jnp.bfloat16)
    ref = jnp.dot(h2, w3b, preferred_element_type=jnp.float32) + params["b3"]

    assert logits.shape == (B, NUM_CLASSES)
    assert loss is None
    assert jnp.allclose(logits, ref, atol=1e-2, rtol=1e-2), (
        float(jnp.max(jnp.abs(logits - ref))))

    # Exercise the labels branch (loss computed in plain JAX), including
    # CrossEntropyLoss's default ignore_index=-100.
    labels = jax.random.randint(k_l, (B,), 0, NUM_CLASSES)
    _, ce = ner_nn_forward(x, prepared, labels=labels)
    ce = jax.block_until_ready(ce)
    assert jnp.isfinite(ce)

    labels_masked = labels.at[0].set(-100)
    _, ce_masked = ner_nn_forward(x, prepared, labels=labels_masked)
    ce_masked = jax.block_until_ready(ce_masked)
    assert jnp.isfinite(ce_masked)

    print("KERNEL_OK")
</pallas_src>

<mosaic_0001>
module attributes {stable_mosaic.version = 11 : i64} {
  func.func @_ner_mlp_kernel(%arg0: i32, %arg1: memref<8x32xf32, #tpu.memory_space<vmem>>, %arg2: memref<32x128xbf16, #tpu.memory_space<vmem>>, %arg3: memref<1x128xf32, #tpu.memory_space<vmem>>, %arg4: memref<128x128xbf16, #tpu.memory_space<vmem>>, %arg5: memref<1x128xf32, #tpu.memory_space<vmem>>, %arg6: memref<128x128xbf16, #tpu.memory_space<vmem>>, %arg7: memref<1x128xf32, #tpu.memory_space<vmem>>, %arg8: memref<8x2xf32, #tpu.memory_space<vmem>>) attributes {dimension_semantics = [#tpu.dimension_semantics<parallel>], iteration_bounds = array<i64: 1>, scalar_prefetch = 0 : i64, scratch_operands = 0 : i64, tpu.core_type = #tpu.core_type<tc>, window_params = [{transform_indices = @transform_0, window_bounds = array<i64: 8, 32>}, {pipeline_mode = #tpu.pipeline_mode<synchronous>, transform_indices = @transform_1, window_bounds = array<i64: 32, 128>}, {pipeline_mode = #tpu.pipeline_mode<synchronous>, transform_indices = @transform_2, window_bounds = array<i64: 1, 128>}, {pipeline_mode = #tpu.pipeline_mode<synchronous>, transform_indices = @transform_3, window_bounds = array<i64: 128, 128>}, {pipeline_mode = #tpu.pipeline_mode<synchronous>, transform_indices = @transform_4, window_bounds = array<i64: 1, 128>}, {pipeline_mode = #tpu.pipeline_mode<synchronous>, transform_indices = @transform_5, window_bounds = array<i64: 128, 128>}, {pipeline_mode = #tpu.pipeline_mode<synchronous>, transform_indices = @transform_6, window_bounds = array<i64: 1, 128>}, {transform_indices = @transform_7, window_bounds = array<i64: 8, 2>}]} {
    %c0 = arith.constant 0 : index
    %c0_0 = arith.constant 0 : index
    %0 = vector.load %arg1[%c0, %c0_0] : memref<8x32xf32, #tpu.memory_space<vmem>>, vector<8x32xf32>
    %1 = arith.truncf %0 : vector<8x32xf32> to vector<8x32xbf16>
    %c0_1 = arith.constant 0 : index
    %c0_2 = arith.constant 0 : index
    %2 = vector.load %arg2[%c0_1, %c0_2] : memref<32x128xbf16, #tpu.memory_space<vmem>>, vector<32x128xbf16>
    %cst = arith.constant dense<0.000000e+00> : vector<8x128xf32>
    %3 = tpu.matmul %1, %2, %cst {dimension_numbers = #tpu.dot_dimension_numbers<[1], [0], [0], [1], [0, 0, 1, 1], [], []>} : vector<8x32xbf16>, vector<32x128xbf16>, vector<8x128xf32> -> vector<8x128xf32>
    %c0_3 = arith.constant 0 : index
    %c0_4 = arith.constant 0 : index
    %4 = vector.load %arg3[%c0_3, %c0_4] : memref<1x128xf32, #tpu.memory_space<vmem>>, vector<1x128xf32>
    %5 = vector.broadcast %4 : vector<1x128xf32> to vector<8x128xf32>
    %6 = arith.addf %3, %5 : vector<8x128xf32>
    %cst_5 = arith.constant 0.000000e+00 : f32
    %7 = vector.broadcast %cst_5 : f32 to vector<8x128xf32>
    %8 = arith.maximumf %6, %7 : vector<8x128xf32>
    %9 = arith.truncf %8 : vector<8x128xf32> to vector<8x128xbf16>
    %c0_6 = arith.constant 0 : index
    %c0_7 = arith.constant 0 : index
    %10 = vector.load %arg4[%c0_6, %c0_7] : memref<128x128xbf16, #tpu.memory_space<vmem>>, vector<128x128xbf16>
    %cst_8 = arith.constant dense<0.000000e+00> : vector<8x128xf32>
    %11 = tpu.matmul %9, %10, %cst_8 {dimension_numbers = #tpu.dot_dimension_numbers<[1], [0], [0], [1], [0, 0, 1, 1], [], []>} : vector<8x128xbf16>, vector<128x128xbf16>, vector<8x128xf32> -> vector<8x128xf32>
    %c0_9 = arith.constant 0 : index
    %c0_10 = arith.constant 0 : index
    %12 = vector.load %arg5[%c0_9, %c0_10] : memref<1x128xf32, #tpu.memory_space<vmem>>, vector<1x128xf32>
    %13 = vector.broadcast %12 : vector<1x128xf32> to vector<8x128xf32>
    %14 = arith.addf %11, %13 : vector<8x128xf32>
    %cst_11 = arith.constant 0.000000e+00 : f32
    %15 = vector.broadcast %cst_11 : f32 to vector<8x128xf32>
    %16 = arith.maximumf %14, %15 : vector<8x128xf32>
    %17 = arith.truncf %16 : vector<8x128xf32> to vector<8x128xbf16>
    %c0_12 = arith.constant 0 : index
    %c0_13 = arith.constant 0 : index
    %18 = vector.load %arg6[%c0_12, %c0_13] : memref<128x128xbf16, #tpu.memory_space<vmem>>, vector<128x128xbf16>
    %cst_14 = arith.constant dense<0.000000e+00> : vector<8x128xf32>
    %19 = tpu.matmul %17, %18, %cst_14 {dimension_numbers = #tpu.dot_dimension_numbers<[1], [0], [0], [1], [0, 0, 1, 1], [], []>} : vector<8x128xbf16>, vector<128x128xbf16>, vector<8x128xf32> -> vector<8x128xf32>
    %c0_15 = arith.constant 0 : index
    %c0_16 = arith.constant 0 : index
    %20 = vector.load %arg7[%c0_15, %c0_16] : memref<1x128xf32, #tpu.memory_space<vmem>>, vector<1x128xf32>
    %21 = vector.broadcast %20 : vector<1x128xf32> to vector<8x128xf32>
    %22 = arith.addf %19, %21 : vector<8x128xf32>
    %23 = vector.extract_strided_slice %22 {offsets = [0, 0], sizes = [8, 2], strides = [1, 1]} : vector<8x128xf32> to vector<8x2xf32>
    %c0_17 = arith.constant 0 : index
    %c0_18 = arith.constant 0 : index
    %24 = vector.load %arg8[%c0_17, %c0_18] : memref<8x2xf32, #tpu.memory_space<vmem>>, vector<8x2xf32>
    tpu.vector_store %arg8[%c0_17, %c0_18], %23 {strides = array<i32>} : memref<8x2xf32, #tpu.memory_space<vmem>>, vector<8x2xf32>,
    return
  }
  func.func @transform_0(%arg0: i32) -> (i32, i32) {
    %c0_i32 = arith.constant 0 : i32
    %c0_i32_0 = arith.constant 0 : i32
    return %arg0, %c0_i32 : i32, i32
  }
  func.func @transform_1(%arg0: i32) -> (i32, i32) {
    %c0_i32 = arith.constant 0 : i32
    %c0_i32_0 = arith.constant 0 : i32
    %c0_i32_1 = arith.constant 0 : i32
    return %c0_i32, %c0_i32_0 : i32, i32
  }
  func.func @transform_2(%arg0: i32) -> (i32, i32) {
    %c0_i32 = arith.constant 0 : i32
    %c0_i32_0 = arith.constant 0 : i32
    %c0_i32_1 = arith.constant 0 : i32
    return %c0_i32, %c0_i32_0 : i32, i32
  }
  func.func @transform_3(%arg0: i32) -> (i32, i32) {
    %c0_i32 = arith.constant 0 : i32
    %c0_i32_0 = arith.constant 0 : i32
    %c0_i32_1 = arith.constant 0 : i32
    return %c0_i32, %c0_i32_0 : i32, i32
  }
  func.func @transform_4(%arg0: i32) -> (i32, i32) {
    %c0_i32 = arith.constant 0 : i32
    %c0_i32_0 = arith.constant 0 : i32
    %c0_i32_1 = arith.constant 0 : i32
    return %c0_i32, %c0_i32_0 : i32, i32
  }
  func.func @transform_5(%arg0: i32) -> (i32, i32) {
    %c0_i32 = arith.constant 0 : i32
    %c0_i32_0 = arith.constant 0 : i32
    %c0_i32_1 = arith.constant 0 : i32
    return %c0_i32, %c0_i32_0 : i32, i32
  }
  func.func @transform_6(%arg0: i32) -> (i32, i32) {
    %c0_i32 = arith.constant 0 : i32
    %c0_i32_0 = arith.constant 0 : i32
    %c0_i32_1 = arith.constant 0 : i32
    return %c0_i32, %c0_i32_0 : i32, i32
  }
  func.func @transform_7(%arg0: i32) -> (i32, i32) {
    %c0_i32 = arith.constant 0 : i32
    %c0_i32_0 = arith.constant 0 : i32
    return %arg0, %c0_i32 : i32, i32
  }
}

</mosaic_0001>

<llo_original>
// kernel: tpu_custom_call.1
$region0: #{tpu_custom_call.1}
  #allocation0 [shape = 'u32[]', space=smem, size = 0x4, offset = 0x4, fixed_abs, tag = 'smem constant byte address 0x4 - core index']
  #allocation1 [shape = 'u32[144,128]{1,0:T(1,128)}', space=vmem, size = 0x12000, scoped, tag = 'internal scratch']
  %s0 = inlined_call_operand.hbm [shape: f32[8,32], index: 0, kind: input, shape index: {}]
  %s1 = inlined_call_operand.hbm [shape: bf16[32,128], index: 1, kind: input, shape index: {}]
  %s2 = inlined_call_operand.vmem [shape: f32[1,128], index: 2, kind: input, shape index: {}]
  %s3 = inlined_call_operand.hbm [shape: bf16[128,128], index: 3, kind: input, shape index: {}]
  %s4 = inlined_call_operand.vmem [shape: f32[1,128], index: 4, kind: input, shape index: {}]
  %s5 = inlined_call_operand.hbm [shape: bf16[128,128], index: 5, kind: input, shape index: {}]
  %s6 = inlined_call_operand.vmem [shape: f32[1,128], index: 6, kind: input, shape index: {}]
  %s7 = inlined_call_operand.vmem [shape: f32[8,2], index: 7, kind: output, shape index: {}]
  %s8 = sld [smem:[#allocation0]]
  $region54: #{tpu_custom_call.1} parent=0
    _
  %s10 = ssub.s32 1, %s8
  %s11 = scalar_select 0, %s10, %s8
  $region1: #{tpu_custom_call.1} parent=0
    #allocation2 [shape = 'u8[4096]{0}', space=vmem, size = 0x1000, scoped, tag = 'input window, operand 0, single buffered']
    #allocation3 [shape = 's32[1]{0}', space=sflag, size = 0x4, scoped, tag = 'scoped memory for tpu_custom_call.1']
    #allocation4 [shape = 'u8[8192]{0}', space=vmem, size = 0x2000, scoped, tag = 'input window, operand 1, single buffered']
    #allocation5 [shape = 's32[1]{0}', space=sflag, size = 0x4, scoped, tag = 'scoped memory for tpu_custom_call.1']
    #allocation6 [shape = 'u8[32768]{0}', space=vmem, size = 0x8000, scoped, tag = 'input window, operand 3, single buffered']
    #allocation7 [shape = 'u8[32768]{0}', space=vmem, size = 0x8000, scoped, tag = 'input window, operand 5, single buffered']
    #allocation8 [shape = 's32[1]{0}', space=sflag, size = 0x4, scoped, tag = 'scoped memory for tpu_custom_call.1']
    %12 = vsyncpa [#allocation3], 0
    %13 = vsyncpa [#allocation5], 0
    %14 = vsyncpa [#allocation8], 0
    // Predicated region
    $region2: #{tpu_custom_call.1} parent=1 // pred_check
      _
    $region3: #{tpu_custom_call.1} parent=1 // pred_check_branch
      %16 = sbr.rel (0) target = $region5
    $region4: #{tpu_custom_call.1} parent=1 // pred_region
      %s18 = ssub.s32 128, 128
      %19 = vsyncadd [#allocation3], %s18
      %s21 = sshll.u32 [#allocation2], 4
      %s22 = int_to_ptr.vmem [resolvable:$true] %s21
      %24 = dma.hbm_to_vmem [thread:$0]  %s0, 128, %s22, [#allocation3]
    $region5: #{tpu_custom_call.1} parent=1 // pred_fallthru
      _
    // Predicated region
    $region6: #{tpu_custom_call.1} parent=1 // pred_check
      _
    $region7: #{tpu_custom_call.1} parent=1 // pred_check_branch
      %26 = sbr.rel (0) target = $region9
    $region8: #{tpu_custom_call.1} parent=1 // pred_region
      %s28 = ssub.s32 256, 256
      %29 = vsyncadd [#allocation5], %s28
      %s30 = sshll.u32 [#allocation4], 4
      %s31 = int_to_ptr.vmem [resolvable:$true] %s30
      %36 = dma.hbm_to_vmem [thread:$0]  %s1, 256, %s31, [#allocation5], 64, 64, 4
    $region9: #{tpu_custom_call.1} parent=1 // pred_fallthru
      _
    // Predicated region
    $region10: #{tpu_custom_call.1} parent=1 // pred_check
      _
    $region11: #{tpu_custom_call.1} parent=1 // pred_check_branch
      %38 = sbr.rel (0) target = $region13
    $region12: #{tpu_custom_call.1} parent=1 // pred_region
      _
    $region13: #{tpu_custom_call.1} parent=1 // pred_fallthru
      _
    // Predicated region
    $region14: #{tpu_custom_call.1} parent=1 // pred_check
      _
    $region15: #{tpu_custom_call.1} parent=1 // pred_check_branch
      %40 = sbr.rel (0) target = $region17
    $region16: #{tpu_custom_call.1} parent=1 // pred_region
      %s42 = ssub.s32 1024, 1024
      %43 = vsyncadd [#allocation5], %s42
      %s44 = sshll.u32 [#allocation6], 4
      %s45 = int_to_ptr.vmem [resolvable:$true] %s44
      %50 = dma.hbm_to_vmem [thread:$0]  %s3, 1024, %s45, [#allocation5], 64, 64, 4
    $region17: #{tpu_custom_call.1} parent=1 // pred_fallthru
      _
    // Predicated region
    $region18: #{tpu_custom_call.1} parent=1 // pred_check
      _
    $region19: #{tpu_custom_call.1} parent=1 // pred_check_branch
      %52 = sbr.rel (0) target = $region21
    $region20: #{tpu_custom_call.1} parent=1 // pred_region
      _
    $region21: #{tpu_custom_call.1} parent=1 // pred_fallthru
      _
    // Predicated region
    $region22: #{tpu_custom_call.1} parent=1 // pred_check
      _
    $region23: #{tpu_custom_call.1} parent=1 // pred_check_branch
      %54 = sbr.rel (0) target = $region25
    $region24: #{tpu_custom_call.1} parent=1 // pred_region
      %s56 = ssub.s32 1024, 1024
      %57 = vsyncadd [#allocation8], %s56
      %s58 = sshll.u32 [#allocation7], 4
      %s59 = int_to_ptr.vmem [resolvable:$true] %s58
      %64 = dma.hbm_to_vmem [thread:$0]  %s5, 1024, %s59, [#allocation8], 64, 64, 4
    $region25: #{tpu_custom_call.1} parent=1 // pred_fallthru
      _
    // Predicated region
    $region26: #{tpu_custom_call.1} parent=1 // pred_check
      _
    $region27: #{tpu_custom_call.1} parent=1 // pred_check_branch
      %66 = sbr.rel (0) target = $region29
    $region28: #{tpu_custom_call.1} parent=1 // pred_region
      _
    $region29: #{tpu_custom_call.1} parent=1 // pred_fallthru
      _
    // Predicated region
    $region30: #{tpu_custom_call.1} parent=1 // pred_check
      _
    $region31: #{tpu_custom_call.1} parent=1 // pred_check_branch
      %68 = sbr.rel (0) target = $region33
    $region32: #{tpu_custom_call.1} parent=1 // pred_region
      %69 = dma.done [#allocation3], 128
    $region33: #{tpu_custom_call.1} parent=1 // pred_fallthru
      _
    // Predicated region
    $region34: #{tpu_custom_call.1} parent=1 // pred_check
      _
    $region35: #{tpu_custom_call.1} parent=1 // pred_check_branch
      %71 = sbr.rel (0) target = $region37
    $region36: #{tpu_custom_call.1} parent=1 // pred_region
      %72 = dma.done [#allocation5], 256
    $region37: #{tpu_custom_call.1} parent=1 // pred_fallthru
      _
    // Predicated region
    $region38: #{tpu_custom_call.1} parent=1 // pred_check
      _
    $region39: #{tpu_custom_call.1} parent=1 // pred_check_branch
      %74 = sbr.rel (0) target = $region41
    $region40: #{tpu_custom_call.1} parent=1 // pred_region
      %75 = dma.done [#allocation5], 1024
    $region41: #{tpu_custom_call.1} parent=1 // pred_fallthru
      _
    // Predicated region
    $region42: #{tpu_custom_call.1} parent=1 // pred_check
      _
    $region43: #{tpu_custom_call.1} parent=1 // pred_check_branch
      %77 = sbr.rel (0) target = $region45
    $region44: #{tpu_custom_call.1} parent=1 // pred_region
      %78 = dma.done [#allocation8], 1024
    $region45: #{tpu_custom_call.1} parent=1 // pred_fallthru
      _
    %v80 = vld [vmem:[#allocation2] sm:$0xff]
    %v81 = vpack.c.bf16 %v80, %v80
    %v82 = vld [vmem:[#allocation4] sm:$0xf]
    %v83 = vld [vmem:[#allocation4 + $0x4] sm:$0xf]
    %v84 = vld [vmem:[#allocation4 + $0x8] sm:$0xf]
    %v85 = vld [vmem:[#allocation4 + $0xc] sm:$0xf]
    %v86 = vld [vmem:[%s2] sm:$0x1]
    %v88 = vlaneseq
    %v89 = vshrl.u32 %v88, 7
    %v90 = vsub.s32 0, %v89
    %v91 = vrot.slane %v86, %v90
    %v97 = vunpack.c.l.b16 %v82
    %v98 = vunpack.c.l.b16 %v83
    %v99 = vunpack.c.l.b16 %v84
    %v100 = vunpack.c.l.b16 %v85
    %v101 = vpack.c.b16 %v98, %v97
    %v102 = vpack.c.b16 %v100, %v99
    %vm105 = vcmask 261120
    %v107 = vsel %vm105, %v81, 0
    %109 = vmatprep.subr.bf16.mxu0 0
    %110 = vmatpush1.bf16.msra.mxu0 %v101
    %111 = vmatprep.subr.bf16.mxu0 0
    %112 = vmatpush1.bf16.msra.mxu0 %v102
    %113 = vmatprep.subr.bf16.mxu0 0
    %114 = vmatpush1.bf16.msra.mxu0 0
    %115 = vmatprep.subr.bf16.mxu0 0
    %116 = vmatpush1.bf16.msra.mxu0 0
    %117 = vmatprep.subr.bf16.mxu0 0
    %118 = vmatpush1.bf16.msra.mxu0 0
    %119 = vmatprep.subr.bf16.mxu0 0
    %120 = vmatpush1.bf16.msra.mxu0 0
    %121 = vmatprep.subr.bf16.mxu0 0
    %122 = vmatpush1.bf16.msra.mxu0 0
    %123 = vmatprep.subr.bf16.mxu0 0
    %124 = vmatpush1.bf16.msra.mxu0 0
    %125 = vmatprep.subr.bf16.mxu0 0
    %126 = vmatpush1.bf16.msra.mxu0 0
    %127 = vmatprep.subr.bf16.mxu0 0
    %128 = vmatpush1.bf16.msra.mxu0 0
    %129 = vmatprep.subr.bf16.mxu0 0
    %130 = vmatpush1.bf16.msra.mxu0 0
    %131 = vmatprep.subr.bf16.mxu0 0
    %132 = vmatpush1.bf16.msra.mxu0 0
    %133 = vmatprep.subr.bf16.mxu0 0
    %134 = vmatpush1.bf16.msra.mxu0 0
    %135 = vmatprep.subr.bf16.mxu0 0
    %136 = vmatpush1.bf16.msra.mxu0 0
    %137 = vmatprep.subr.bf16.mxu0 0
    %138 = vmatpush1.bf16.msra.mxu0 0
    %139 = vmatprep.subr.bf16.mxu0 0
    %140 = vmatpush1.bf16.msra.mxu0 0
    %141 = vmatprep.mubr.bf16.mxu0 0
    %142 = vmatmul.mubr.bf16.gmra.mrb[0].mxu0 %v107
    %v143 = vpop.f32.mrb[0].mxu0
    %v144 = vadd.f32 %v91, %v143
    %v145 = vpop.f32.mrb[0].mxu0
    %v146 = vpop.f32.mrb[0].mxu0
    %v147 = vpop.f32.mrb[0].mxu0
    %148 = vdwg.mxu0
    %v149 = vmax.f32 %v144, 0.0
    %v150 = vpack.c.bf16 %v149, %v149
    %v151 = vld [vmem:[#allocation6] sm:$0xf]
    %v152 = vld [vmem:[#allocation6 + $0x4] sm:$0xf]
    %v153 = vld [vmem:[#allocation6 + $0x8] sm:$0xf]
    %v154 = vld [vmem:[#allocation6 + $0xc] sm:$0xf]
    %v155 = vld [vmem:[#allocation6 + $0x10] sm:$0xf]
    %v156 = vld [vmem:[#allocation6 + $0x14] sm:$0xf]
    %v157 = vld [vmem:[#allocation6 + $0x18] sm:$0xf]
    %v158 = vld [vmem:[#allocation6 + $0x1c] sm:$0xf]
    %v159 = vld [vmem:[#allocation6 + $0x20] sm:$0xf]
    %v160 = vld [vmem:[#allocation6 + $0x24] sm:$0xf]
    %v161 = vld [vmem:[#allocation6 + $0x28] sm:$0xf]
    %v162 = vld [vmem:[#allocation6 + $0x2c] sm:$0xf]
    %v163 = vld [vmem:[#allocation6 + $0x30] sm:$0xf]
    %v164 = vld [vmem:[#allocation6 + $0x34] sm:$0xf]
    %v165 = vld [vmem:[#allocation6 + $0x38] sm:$0xf]
    %v166 = vld [vmem:[#allocation6 + $0x3c] sm:$0xf]
    %v167 = vld [vmem:[%s4] sm:$0x1]
    %v169 = vlaneseq
    %v170 = vshrl.u32 %v169, 7
    %v171 = vsub.s32 0, %v170
    %v172 = vrot.slane %v167, %v171
    %v190 = vunpack.c.l.b16 %v151
    %v191 = vunpack.c.l.b16 %v152
    %v192 = vunpack.c.l.b16 %v153
    %v193 = vunpack.c.l.b16 %v154
    %v194 = vunpack.c.l.b16 %v155
    %v195 = vunpack.c.l.b16 %v156
    %v196 = vunpack.c.l.b16 %v157
    %v197 = vunpack.c.l.b16 %v158
    %v198 = vunpack.c.l.b16 %v159
    %v199 = vunpack.c.l.b16 %v160
    %v200 = vunpack.c.l.b16 %v161
    %v201 = vunpack.c.l.b16 %v162
    %v202 = vunpack.c.l.b16 %v163
    %v203 = vunpack.c.l.b16 %v164
    %v204 = vunpack.c.l.b16 %v165
    %v205 = vunpack.c.l.b16 %v166
    %v206 = vpack.c.b16 %v191, %v190
    %v207 = vpack.c.b16 %v193, %v192
    %v208 = vpack.c.b16 %v195, %v194
    %v209 = vpack.c.b16 %v197, %v196
    %v210 = vpack.c.b16 %v199, %v198
    %v211 = vpack.c.b16 %v201, %v200
    %v212 = vpack.c.b16 %v203, %v202
    %v213 = vpack.c.b16 %v205, %v204
    %222 = vmatprep.subr.bf16.mxu0 0
    %223 = vmatpush1.bf16.msra.mxu0 %v206
    %224 = vmatprep.subr.bf16.mxu0 0
    %225 = vmatpush1.bf16.msra.mxu0 %v207
    %226 = vmatprep.subr.bf16.mxu0 0
    %227 = vmatpush1.bf16.msra.mxu0 %v208
    %228 = vmatprep.subr.bf16.mxu0 0
    %229 = vmatpush1.bf16.msra.mxu0 %v209
    %230 = vmatprep.subr.bf16.mxu0 0
    %231 = vmatpush1.bf16.msra.mxu0 %v210
    %232 = vmatprep.subr.bf16.mxu0 0
    %233 = vmatpush1.bf16.msra.mxu0 %v211
    %234 = vmatprep.subr.bf16.mxu0 0
    %235 = vmatpush1.bf16.msra.mxu0 %v212
    %236 = vmatprep.subr.bf16.mxu0 0
    %237 = vmatpush1.bf16.msra.mxu0 %v213
    %238 = vmatprep.subr.bf16.mxu0 0
    %239 = vmatpush1.bf16.msra.mxu0 0
    %240 = vmatprep.subr.bf16.mxu0 0
    %241 = vmatpush1.bf16.msra.mxu0 0
    %242 = vmatprep.subr.bf16.mxu0 0
    %243 = vmatpush1.bf16.msra.mxu0 0
    %244 = vmatprep.subr.bf16.mxu0 0
    %245 = vmatpush1.bf16.msra.mxu0 0
    %246 = vmatprep.subr.bf16.mxu0 0
    %247 = vmatpush1.bf16.msra.mxu0 0
    %248 = vmatprep.subr.bf16.mxu0 0
    %249 = vmatpush1.bf16.msra.mxu0 0
    %250 = vmatprep.subr.bf16.mxu0 0
    %251 = vmatpush1.bf16.msra.mxu0 0
    %252 = vmatprep.subr.bf16.mxu0 0
    %253 = vmatpush1.bf16.msra.mxu0 0
    %254 = vmatprep.mubr.bf16.mxu0 0
    %255 = vmatmul.mubr.bf16.gmra.mrb[0].mxu0 %v150
    %v256 = vpop.f32.mrb[0].mxu0
    %v257 = vadd.f32 %v172, %v256
    %v258 = vpop.f32.mrb[0].mxu0
    %v259 = vpop.f32.mrb[0].mxu0
    %v260 = vpop.f32.mrb[0].mxu0
    %261 = vdwg.mxu0
    %v262 = vmax.f32 %v257, 0.0
    %v263 = vpack.c.bf16 %v262, %v262
    %v264 = vld [vmem:[#allocation7] sm:$0xf]
    %v265 = vld [vmem:[#allocation7 + $0x4] sm:$0xf]
    %v266 = vld [vmem:[#allocation7 + $0x8] sm:$0xf]
    %v267 = vld [vmem:[#allocation7 + $0xc] sm:$0xf]
    %v268 = vld [vmem:[#allocation7 + $0x10] sm:$0xf]
    %v269 = vld [vmem:[#allocation7 + $0x14] sm:$0xf]
    %v270 = vld [vmem:[#allocation7 + $0x18] sm:$0xf]
    %v271 = vld [vmem:[#allocation7 + $0x1c] sm:$0xf]
    %v272 = vld [vmem:[#allocation7 + $0x20] sm:$0xf]
    %v273 = vld [vmem:[#allocation7 + $0x24] sm:$0xf]
    %v274 = vld [vmem:[#allocation7 + $0x28] sm:$0xf]
    %v275 = vld [vmem:[#allocation7 + $0x2c] sm:$0xf]
    %v276 = vld [vmem:[#allocation7 + $0x30] sm:$0xf]
    %v277 = vld [vmem:[#allocation7 + $0x34] sm:$0xf]
    %v278 = vld [vmem:[#allocation7 + $0x38] sm:$0xf]
    %v279 = vld [vmem:[#allocation7 + $0x3c] sm:$0xf]
    %v280 = vld [vmem:[%s6] sm:$0x1]
    %v282 = vlaneseq
    %v283 = vshrl.u32 %v282, 7
    %v284 = vsub.s32 0, %v283
    %v285 = vrot.slane %v280, %v284
    %v303 = vunpack.c.l.b16 %v264
    %v304 = vunpack.c.l.b16 %v265
    %v305 = vunpack.c.l.b16 %v266
    %v306 = vunpack.c.l.b16 %v267
    %v307 = vunpack.c.l.b16 %v268
    %v308 = vunpack.c.l.b16 %v269
    %v309 = vunpack.c.l.b16 %v270
    %v310 = vunpack.c.l.b16 %v271
    %v311 = vunpack.c.l.b16 %v272
    %v312 = vunpack.c.l.b16 %v273
    %v313 = vunpack.c.l.b16 %v274
    %v314 = vunpack.c.l.b16 %v275
    %v315 = vunpack.c.l.b16 %v276
    %v316 = vunpack.c.l.b16 %v277
    %v317 = vunpack.c.l.b16 %v278
    %v318 = vunpack.c.l.b16 %v279
    %v319 = vpack.c.b16 %v304, %v303
    %v320 = vpack.c.b16 %v306, %v305
    %v321 = vpack.c.b16 %v308, %v307
    %v322 = vpack.c.b16 %v310, %v309
    %v323 = vpack.c.b16 %v312, %v311
    %v324 = vpack.c.b16 %v314, %v313
    %v325 = vpack.c.b16 %v316, %v315
    %v326 = vpack.c.b16 %v318, %v317
    %335 = vmatprep.subr.bf16.mxu0 0
    %336 = vmatpush1.bf16.msra.mxu0 %v319
    %337 = vmatprep.subr.bf16.mxu0 0
    %338 = vmatpush1.bf16.msra.mxu0 %v320
    %339 = vmatprep.subr.bf16.mxu0 0
    %340 = vmatpush1.bf16.msra.mxu0 %v321
    %341 = vmatprep.subr.bf16.mxu0 0
    %342 = vmatpush1.bf16.msra.mxu0 %v322
    %343 = vmatprep.subr.bf16.mxu0 0
    %344 = vmatpush1.bf16.msra.mxu0 %v323
    %345 = vmatprep.subr.bf16.mxu0 0
    %346 = vmatpush1.bf16.msra.mxu0 %v324
    %347 = vmatprep.subr.bf16.mxu0 0
    %348 = vmatpush1.bf16.msra.mxu0 %v325
    %349 = vmatprep.subr.bf16.mxu0 0
    %350 = vmatpush1.bf16.msra.mxu0 %v326
    %351 = vmatprep.subr.bf16.mxu0 0
    %352 = vmatpush1.bf16.msra.mxu0 0
    %353 = vmatprep.subr.bf16.mxu0 0
    %354 = vmatpush1.bf16.msra.mxu0 0
    %355 = vmatprep.subr.bf16.mxu0 0
    %356 = vmatpush1.bf16.msra.mxu0 0
    %357 = vmatprep.subr.bf16.mxu0 0
    %358 = vmatpush1.bf16.msra.mxu0 0
    %359 = vmatprep.subr.bf16.mxu0 0
    %360 = vmatpush1.bf16.msra.mxu0 0
    %361 = vmatprep.subr.bf16.mxu0 0
    %362 = vmatpush1.bf16.msra.mxu0 0
    %363 = vmatprep.subr.bf16.mxu0 0
    %364 = vmatpush1.bf16.msra.mxu0 0
    %365 = vmatprep.subr.bf16.mxu0 0
    %366 = vmatpush1.bf16.msra.mxu0 0
    %367 = vmatprep.mubr.bf16.mxu0 0
    %368 = vmatmul.mubr.bf16.gmra.mrb[0].mxu0 %v263
    %v369 = vpop.f32.mrb[0].mxu0
    %v370 = vadd.f32 %v285, %v369
    %v371 = vpop.f32.mrb[0].mxu0
    %v372 = vpop.f32.mrb[0].mxu0
    %v373 = vpop.f32.mrb[0].mxu0
    %374 = vdwg.mxu0
    %vm375 = vcmask 15360
    %376 = vst.msk [vmem:[%s7] sm:$0xff] %vm375, %v370
    // Predicated region
    $region46: #{tpu_custom_call.1} parent=1 // pred_check
      _
    $region47: #{tpu_custom_call.1} parent=1 // pred_check_branch
      %378 = sbr.rel (0) target = $region49
    $region48: #{tpu_custom_call.1} parent=1 // pred_region
      _
    $region49: #{tpu_custom_call.1} parent=1 // pred_fallthru
      _
    // Predicated region
    $region50: #{tpu_custom_call.1} parent=1 // pred_check
      _
    $region51: #{tpu_custom_call.1} parent=1 // pred_check_branch
      %380 = sbr.rel (0) target = $region53
    $region52: #{tpu_custom_call.1} parent=1 // pred_region
      _
    $region53: #{tpu_custom_call.1} parent=1 // pred_fallthru
      _
    %381 = vsyncpa [#allocation3], 1
    %382 = vsyncpa [#allocation5], 1
    %383 = vsyncpa [#allocation8], 1

</llo_original>
